<compile_context>
chip_gen: v7x
topology: tpu7x:2x2x1
jax: 0.10.0
libtpu: 0.0.40
codegen_flags: <defaults>
</compile_context>

<pallas_src>
import functools

import jax
import jax.numpy as jnp
from jax.experimental import pallas as pl
from jax.experimental.pallas import tpu as pltpu

LANES = 128
TARGET_BLOCK_BYTES = 2 * 1024 * 1024   # ~2 MiB input block for every dtype
MAX_ROW_TILE = 16384                   # hard cap (int8: 16384 x 128 = 2 MiB)


def _cdiv(a, b):
    return -(-a // b)


def _round_up(a, b):
    return _cdiv(a, b) * b


def _sumsq_kernel(x_ref, out_ref, acc_ref, *, rows, row_tile, needs_mask):
    i = pl.program_id(0)
    last = pl.num_programs(0) - 1

    @pl.when(i == 0)
    def _():
        acc_ref[...] = jnp.zeros_like(acc_ref)

    xv = x_ref[...].astype(jnp.float32)   # in-kernel upcast
    sq = xv * xv

    if needs_mask:
        # Only the final block can contain rows past the logical end (the block
        # window overshoots the array).  Gate the iota/compare/select mask behind
        # pl.when so steady-state blocks stay pure square+add.
        @pl.when(i != last)
        def _():
            acc_ref[...] += sq

        @pl.when(i == last)
        def _():
            row0 = i * row_tile
            local_row = jax.lax.broadcasted_iota(
                jnp.int32, (row_tile, LANES), 0)
            acc_ref[...] += jnp.where(row0 + local_row < rows, sq, 0.0)
    else:
        acc_ref[...] += sq

    @pl.when(i == last)
    def _():
        # Single finalize reduce (sublane/XLU) -> tiny (1,128) HBM writeback.
        out_ref[...] = jnp.sum(acc_ref[...], axis=0, keepdims=True)


def _sum_of_squares(x):
    """Global sum(x**2) as an f32 scalar via a tiled Pallas reduction."""
    n = int(x.size)
    if n == 0:
        return jnp.float32(0.0)

    flat = x.reshape(-1)
    rows = n // LANES
    rem = n % LANES

    # Ragged tail (< 128 elements): tiny jnp expression, no full-tensor pad copy.
    tail = jnp.float32(0.0)
    if rem:
        tail_f = flat[rows * LANES:].astype(jnp.float32)
        tail = jnp.sum(tail_f * tail_f)
        if rows == 0:
            return tail                         # whole input is smaller than 128
        flat = flat[: rows * LANES]

    x2d = flat.reshape(rows, LANES)

    # Block sized by bytes (~2 MiB), rounded to the dtype's sublane packing.
    itemsize = jnp.dtype(x.dtype).itemsize
    sub = {4: 8, 2: 16, 1: 32}.get(itemsize, 8)
    target_rows = max(sub, TARGET_BLOCK_BYTES // (LANES * itemsize))
    target_rows = min(target_rows, MAX_ROW_TILE)
    row_tile = min(_round_up(target_rows, sub), _round_up(rows, sub))

    total_blocks = _cdiv(rows, row_tile)
    needs_mask = (total_blocks * row_tile) != rows

    kernel = functools.partial(
        _sumsq_kernel, rows=rows, row_tile=row_tile, needs_mask=needs_mask)

    partial = pl.pallas_call(
        kernel,
        out_shape=jax.ShapeDtypeStruct((1, LANES), jnp.float32),
        grid_spec=pltpu.PrefetchScalarGridSpec(
            num_scalar_prefetch=0,
            grid=(total_blocks,),
            in_specs=[pl.BlockSpec((row_tile, LANES), lambda i: (i, 0))],
            out_specs=pl.BlockSpec((1, LANES), lambda i: (0, 0)),
            scratch_shapes=[pltpu.VMEM((row_tile, LANES), jnp.float32)],
        ),
        compiler_params=pltpu.CompilerParams(
            dimension_semantics=("arbitrary",),
            vmem_limit_bytes=32 * 1024 * 1024,
        ),
    )(x2d)

    # Final cross-lane reduce over just 128 f32 values (tiny XLA op).
    return jnp.sum(partial) + tail


def coefficient_regularization(x, mode="mean"):
    if mode == "None":
        return x                                  # identity pass-through
    total = _sum_of_squares(x)
    if mode == "mean":
        # sum(mean(x**2, dim=0)) == sum(x**2) / x.shape[0]; divide hoisted out.
        return total / jnp.float32(x.shape[0])
    if mode == "sum":
        return total
    raise ValueError(f"unknown mode: {mode!r}")


if __name__ == "__main__":
    key = jax.random.PRNGKey(0)
    x = jax.random.normal(key, (2, 4, 16, 16), dtype=jnp.float32)  # NCHW

    out_mean = coefficient_regularization(x, mode="mean")
    jax.block_until_ready(out_mean)
    ref_mean = jnp.sum(jnp.mean(x ** 2, axis=0))
    assert jnp.allclose(out_mean, ref_mean, rtol=1e-5, atol=1e-5), (out_mean, ref_mean)

    out_sum = coefficient_regularization(x, mode="sum")
    jax.block_until_ready(out_sum)
    ref_sum = jnp.sum(x ** 2)
    assert jnp.allclose(out_sum, ref_sum, rtol=1e-5, atol=1e-5), (out_sum, ref_sum)

    out_none = coefficient_regularization(x, mode="None")
    assert out_none.shape == x.shape

    # Non-lane-aligned shape: exercises the ragged-tail path + in-kernel mask.
    y = jax.random.normal(jax.random.PRNGKey(1), (2, 3, 5, 7), dtype=jnp.float32)
    out_y = coefficient_regularization(y, mode="sum")
    jax.block_until_ready(out_y)
    ref_y = jnp.sum(y ** 2)
    assert jnp.allclose(out_y, ref_y, rtol=1e-5, atol=1e-5), (out_y, ref_y)

    print("KERNEL_OK")
</pallas_src>

<mosaic_0001>
module attributes {stable_mosaic.version = 11 : i64} {
  func.func @_sumsq_kernel(%arg0: i32, %arg1: memref<16x128xf32, #tpu.memory_space<vmem>>, %arg2: memref<1x128xf32, #tpu.memory_space<vmem>>, %arg3: memref<16x128xf32, #tpu.memory_space<vmem>>) attributes {dimension_semantics = [#tpu.dimension_semantics<arbitrary>], iteration_bounds = array<i64: 1>, scalar_prefetch = 0 : i64, scratch_operands = 1 : i64, tpu.core_type = #tpu.core_type<tc>, window_params = [{transform_indices = @transform_0, window_bounds = array<i64: 16, 128>}, {pipeline_mode = #tpu.pipeline_mode<synchronous>, transform_indices = @transform_1, window_bounds = array<i64: 1, 128>}]} {
    %c0_i32 = arith.constant 0 : i32
    %0 = arith.cmpi eq, %arg0, %c0_i32 : i32
    %1 = arith.extui %0 : i1 to i32
    %c0_i32_0 = arith.constant 0 : i32
    %2 = arith.cmpi ne, %1, %c0_i32_0 : i32
    scf.if %2 {
      %cst = arith.constant 0.000000e+00 : f32
      %11 = vector.broadcast %cst : f32 to vector<16x128xf32>
      %c0_8 = arith.constant 0 : index
      %c0_9 = arith.constant 0 : index
      %12 = vector.load %arg3[%c0_8, %c0_9] : memref<16x128xf32, #tpu.memory_space<vmem>>, vector<16x128xf32>
      tpu.vector_store %arg3[%c0_8, %c0_9], %11 {strides = array<i32>} : memref<16x128xf32, #tpu.memory_space<vmem>>, vector<16x128xf32>,
    } else {
    }
    %c0 = arith.constant 0 : index
    %c0_1 = arith.constant 0 : index
    %3 = vector.load %arg1[%c0, %c0_1] : memref<16x128xf32, #tpu.memory_space<vmem>>, vector<16x128xf32>
    %4 = arith.mulf %3, %3 : vector<16x128xf32>
    %c0_2 = arith.constant 0 : index
    %c0_3 = arith.constant 0 : index
    %5 = vector.load %arg3[%c0_2, %c0_3] : memref<16x128xf32, #tpu.memory_space<vmem>>, vector<16x128xf32>
    %6 = arith.addf %5, %4 : vector<16x128xf32>
    %c0_4 = arith.constant 0 : index
    %c0_5 = arith.constant 0 : index
    %7 = vector.load %arg3[%c0_4, %c0_5] : memref<16x128xf32, #tpu.memory_space<vmem>>, vector<16x128xf32>
    tpu.vector_store %arg3[%c0_4, %c0_5], %6 {strides = array<i32>} : memref<16x128xf32, #tpu.memory_space<vmem>>, vector<16x128xf32>,
    %c0_i32_6 = arith.constant 0 : i32
    %8 = arith.cmpi eq, %arg0, %c0_i32_6 : i32
    %9 = arith.extui %8 : i1 to i32
    %c0_i32_7 = arith.constant 0 : i32
    %10 = arith.cmpi ne, %9, %c0_i32_7 : i32
    scf.if %10 {
      %c0_8 = arith.constant 0 : index
      %c0_9 = arith.constant 0 : index
      %11 = vector.load %arg3[%c0_8, %c0_9] : memref<16x128xf32, #tpu.memory_space<vmem>>, vector<16x128xf32>
      %cst = arith.constant dense<0.000000e+00> : vector<128xf32>
      %12 = vector.multi_reduction <add>, %11, %cst [0] : vector<16x128xf32> to vector<128xf32>
      %13 = vector.shape_cast %12 : vector<128xf32> to vector<1x128xf32>
      %c0_10 = arith.constant 0 : index
      %c0_11 = arith.constant 0 : index
      %14 = vector.load %arg2[%c0_10, %c0_11] : memref<1x128xf32, #tpu.memory_space<vmem>>, vector<1x128xf32>
      tpu.vector_store %arg2[%c0_10, %c0_11], %13 {strides = array<i32>} : memref<1x128xf32, #tpu.memory_space<vmem>>, vector<1x128xf32>,
    } else {
    }
    return
  }
  func.func @transform_0(%arg0: i32) -> (i32, i32) {
    %c0_i32 = arith.constant 0 : i32
    %c0_i32_0 = arith.constant 0 : i32
    return %arg0, %c0_i32 : i32, i32
  }
  func.func @transform_1(%arg0: i32) -> (i32, i32) {
    %c0_i32 = arith.constant 0 : i32
    %c0_i32_0 = arith.constant 0 : i32
    %c0_i32_1 = arith.constant 0 : i32
    return %c0_i32, %c0_i32_0 : i32, i32
  }
}

</mosaic_0001>

<llo_original>
// kernel: tpu_custom_call.1
$region0: #{tpu_custom_call.1}
  #allocation0 [shape = 'u32[]', space=smem, size = 0x4, offset = 0x4, fixed_abs, tag = 'smem constant byte address 0x4 - core index']
  #allocation1 [shape = 'u32[144,128]{1,0:T(1,128)}', space=vmem, size = 0x12000, scoped, tag = 'internal scratch']
  #allocation2 [shape = 'f32[16,128]{1,0:T(8,128)}', space=vmem, size = 0x2000, scoped, tag = 'scratch operand']
  %s0 = inlined_call_operand.hbm [shape: f32[16,128], index: 0, kind: input, shape index: {}]
  %s1 = inlined_call_operand.hbm [shape: f32[1,128], index: 1, kind: output, shape index: {}]
  %s2 = sld [smem:[#allocation0]]
  $region26: #{tpu_custom_call.1} parent=0
    _
  %s4 = ssub.s32 1, %s2
  %s5 = scalar_select 0, %s4, %s2
  $region1: #{tpu_custom_call.1} parent=0
    #allocation3 [shape = 'u8[8192]{0}', space=vmem, size = 0x2000, scoped, tag = 'input window, operand 0, single buffered']
    #allocation4 [shape = 's32[1]{0}', space=sflag, size = 0x4, scoped, tag = 'scoped memory for tpu_custom_call.1']
    #allocation5 [shape = 's32[1]{0}', space=sflag, size = 0x4, scoped, tag = 'scoped memory for tpu_custom_call.1']
    #allocation6 [shape = 'u8[512]{0}', space=vmem, size = 0x400, scoped, tag = 'output window, operand 0, single buffered']
    %6 = vsyncpa [#allocation4], 0
    %7 = vsyncpa [#allocation5], 0
    // Predicated region
    $region2: #{tpu_custom_call.1} parent=1 // pred_check
      _
    $region3: #{tpu_custom_call.1} parent=1 // pred_check_branch
      %9 = sbr.rel (0) target = $region5
    $region4: #{tpu_custom_call.1} parent=1 // pred_region
      %s11 = ssub.s32 256, 256
      %12 = vsyncadd [#allocation4], %s11
      %s13 = sshll.u32 [#allocation3], 4
      %s14 = int_to_ptr.vmem [resolvable:$true] %s13
      %19 = dma.hbm_to_vmem [thread:$0]  %s0, 256, %s14, [#allocation4], 128, 128, 8
    $region5: #{tpu_custom_call.1} parent=1 // pred_fallthru
      _
    // Predicated region
    $region6: #{tpu_custom_call.1} parent=1 // pred_check
      _
    $region7: #{tpu_custom_call.1} parent=1 // pred_check_branch
      %21 = sbr.rel (0) target = $region9
    $region8: #{tpu_custom_call.1} parent=1 // pred_region
      %22 = dma.done [#allocation4], 256
    $region9: #{tpu_custom_call.1} parent=1 // pred_fallthru
      _
    %p23 = scmp.eq.s32.totalorder 0, 0
    // Predicated region
    $region10: #{tpu_custom_call.1} parent=1 // pred_check
      %p24 = pneg %p23
    $region11: #{tpu_custom_call.1} parent=1 // pred_check_branch
      %26 = sbr.rel (%p24) target = $region13
    $region12: #{tpu_custom_call.1} parent=1 // pred_region
      %27 = vst [vmem:[#allocation2] sm:$0xff] 0.0
      %28 = vst [vmem:[#allocation2 + $0x8] sm:$0xff] 0.0
    $region13: #{tpu_custom_call.1} parent=1 // pred_fallthru
      _
    %v29 = vld [vmem:[#allocation3] sm:$0xff]
    %v30 = vld [vmem:[#allocation3 + $0x8] sm:$0xff]
    %v31 = vmul.f32 %v29, %v29
    %v32 = vmul.f32 %v30, %v30
    %v33 = vld [vmem:[#allocation2] sm:$0xff]
    %v34 = vld [vmem:[#allocation2 + $0x8] sm:$0xff]
    %v35 = vadd.f32 %v33, %v31
    %v36 = vadd.f32 %v34, %v32
    %37 = vst [vmem:[#allocation2] sm:$0xff] %v35
    %38 = vst [vmem:[#allocation2 + $0x8] sm:$0xff] %v36
    // Predicated region
    $region14: #{tpu_custom_call.1} parent=1 // pred_check
      %p39 = pneg %p23
    $region15: #{tpu_custom_call.1} parent=1 // pred_check_branch
      %41 = sbr.rel (%p39) target = $region17
    $region16: #{tpu_custom_call.1} parent=1 // pred_region
      %v42 = vld [vmem:[#allocation2] sm:$0xff]
      %v43 = vld [vmem:[#allocation2 + $0x8] sm:$0xff]
      %v44 = vadd.f32 %v42, %v43
      %v45 = vrot.slane %v44, 4
      %v46 = vadd.f32 %v44, %v45
      %v47 = vrot.slane %v46, 2
      %v48 = vadd.f32 %v46, %v47
      %v49 = vrot.slane %v48, 1
      %v50 = vadd.f32 %v48, %v49
      %51 = vst [vmem:[#allocation6] sm:$0x1] %v50
    $region17: #{tpu_custom_call.1} parent=1 // pred_fallthru
      _
    // Predicated region
    $region18: #{tpu_custom_call.1} parent=1 // pred_check
      _
    $region19: #{tpu_custom_call.1} parent=1 // pred_check_branch
      %53 = sbr.rel (0) target = $region21
    $region20: #{tpu_custom_call.1} parent=1 // pred_region
      %s55 = ssub.s32 16, 16
      %56 = vsyncadd [#allocation5], %s55
      %s58 = sshll.u32 [#allocation6], 4
      %s59 = int_to_ptr.vmem [resolvable:$true] %s58
      %61 = dma.vmem_to_hbm [thread:$0]  %s59, 16, %s1, [#allocation5]
    $region21: #{tpu_custom_call.1} parent=1 // pred_fallthru
      _
    // Predicated region
    $region22: #{tpu_custom_call.1} parent=1 // pred_check
      _
    $region23: #{tpu_custom_call.1} parent=1 // pred_check_branch
      %63 = sbr.rel (0) target = $region25
    $region24: #{tpu_custom_call.1} parent=1 // pred_region
      %64 = dma.done [#allocation5], 16
    $region25: #{tpu_custom_call.1} parent=1 // pred_fallthru
      _
    %65 = vsyncpa [#allocation4], 1
    %66 = vsyncpa [#allocation5], 1

</llo_original>
